<compile_context>
chip_gen: v6e
topology: v6e:2x2x1
jax: 0.10.0
libtpu: 0.0.40
codegen_flags: <defaults>
</compile_context>

<pallas_src>
import jax
import jax.numpy as jnp
import numpy as np
from jax.experimental import pallas as pl
from jax.experimental.pallas import tpu as pltpu

DEPTH = 3
WIDTH = 32
PACK = 4                      # batch rows folded into the 128-lane dimension
LANES = PACK * WIDTH          # 128
BN_EPS = 1e-5


def fc_res_kernel(x_ref, w_ref, p_ref, o_ref):
    """One batch-tile of the fused residual MLP stack (all layers).

    x_ref : (tile, 128)    4 batch rows packed along lanes (I/O dtype, e.g. bf16)
    w_ref : (D, 128, 128)  block-diagonal weights (4 copies of the 32x32 W)
    p_ref : (D, 3, 128)    [bias, bn_scale, bn_shift], lane-tiled x4
    """
    depth = w_ref.shape[0]                 # static at trace time
    p = p_ref[...]                         # tiny, keep resident in vregs
    x = x_ref[...].astype(jnp.float32)
    for d in range(depth):                 # static unroll (depth is tiny & fixed)
        # Linear (MXU, f32 accumulation) + bias
        y = jnp.dot(x, w_ref[d], preferred_element_type=jnp.float32) + p[d, 0]
        # ReLU
        y = jnp.maximum(y, 0.0)
        # Folded eval-mode BatchNorm: y * scale + shift
        y = y * p[d, 1] + p[d, 2]
        # Residual skip (res=True)
        x = y + x
    o_ref[...] = x.astype(o_ref.dtype)


def _pick_tile(packed_rows, max_tile=2048):
    """Largest multiple-of-8 divisor of packed_rows, capped so the grid keeps
    >=2 steps (both v7x TensorCores get work) and tiles stay ~<=1 MiB."""
    if packed_rows <= 8:
        return packed_rows
    cap = min(max_tile, max(8, packed_rows // 2))
    t = (cap // 8) * 8
    while t >= 8:
        if packed_rows % t == 0:
            return t
        t -= 8
    return packed_rows


def fully_connected(x, w, b, gamma, beta, mean, var):
    """x: (N, WIDTH) in the I/O dtype (bf16 recommended).
    w: (DEPTH, WIDTH, WIDTH) pre-transposed to (fan_in, fan_out) so y = x @ w.
    b / gamma / beta / mean / var: (DEPTH, WIDTH) float32."""
    N, Wd = x.shape
    D = w.shape[0]
    io_dtype = x.dtype

    # ---- host-side parameter prep --------------------------------------
    # Fold eval-mode BN into a single per-layer scale/shift.
    scale = gamma * jax.lax.rsqrt(var.astype(jnp.float32) + BN_EPS)
    shift = beta - mean * scale
    # Lane-tile params x PACK so they line up with the packed batch groups.
    params = jnp.stack([jnp.tile(b, (1, PACK)),
                        jnp.tile(scale, (1, PACK)),
                        jnp.tile(shift, (1, PACK))], axis=1).astype(jnp.float32)
    # Block-diagonal weights: PACK copies of the (32,32) W on the diagonal.
    eye = jnp.eye(PACK, dtype=jnp.float32)
    w_bd = jnp.einsum('gh,dio->dgiho', eye, w.astype(jnp.float32))
    w_bd = w_bd.reshape(D, LANES, LANES)

    # ---- lane-dense packing of the batch --------------------------------
    # Pad N to a multiple of PACK*8 so blocks satisfy the (8,128) tiling rule.
    pad = (-N) % (PACK * 8)
    if pad:
        x = jnp.concatenate([x, jnp.zeros((pad, Wd), io_dtype)], axis=0)
    Np = N + pad
    xp = x.reshape(Np // PACK, LANES)          # (rows, 128) lane-dense

    rows = Np // PACK
    tile = _pick_tile(rows)
    grid = (rows // tile,)

    out = pl.pallas_call(
        fc_res_kernel,
        out_shape=jax.ShapeDtypeStruct((rows, LANES), io_dtype),
        grid_spec=pltpu.PrefetchScalarGridSpec(
            num_scalar_prefetch=0,
            grid=grid,                                            # batch tiles
            in_specs=[
                pl.BlockSpec((tile, LANES), lambda i: (i, 0)),        # x tile
                pl.BlockSpec((D, LANES, LANES), lambda i: (0, 0, 0)), # weights
                pl.BlockSpec((D, 3, LANES), lambda i: (0, 0, 0)),     # params
            ],
            out_specs=pl.BlockSpec((tile, LANES), lambda i: (i, 0)),
        ),
        compiler_params=pltpu.CompilerParams(
            dimension_semantics=("parallel",)),
    )(xp, w_bd, params)

    return out.reshape(Np, Wd)[:N]


def reference(x, w, b, gamma, beta, mean, var):
    """Pure-JAX f32 reference of the un-folded Linear->ReLU->BN->residual stack."""
    h = x.astype(jnp.float32)
    for d in range(w.shape[0]):
        y = h @ w[d].astype(jnp.float32) + b[d]
        y = jnp.maximum(y, 0.0)
        y = (y - mean[d]) * jax.lax.rsqrt(var[d] + BN_EPS) * gamma[d] + beta[d]
        h = y + h
    return h


if __name__ == "__main__":
    key = jax.random.PRNGKey(0)
    kx, kw, kb, kg, kbt, km, kv = jax.random.split(key, 7)

    N = 64                       # small test batch; production N can be huge
    x = jax.random.normal(kx, (N, WIDTH), jnp.float32)

    # Deterministic parameter init (lookup_normal_init ~ kaiming-normal for relu)
    std = np.sqrt(2.0 / WIDTH)
    w = jax.random.normal(kw, (DEPTH, WIDTH, WIDTH), jnp.float32) * std   # (in,out)
    b = 0.01 * jax.random.normal(kb, (DEPTH, WIDTH), jnp.float32)
    gamma = 1.0 + 0.1 * jax.random.normal(kg, (DEPTH, WIDTH), jnp.float32)
    beta = 0.1 * jax.random.normal(kbt, (DEPTH, WIDTH), jnp.float32)
    mean = 0.1 * jax.random.normal(km, (DEPTH, WIDTH), jnp.float32)
    var = 1.0 + 0.1 * jnp.abs(jax.random.normal(kv, (DEPTH, WIDTH), jnp.float32))

    # bf16 I/O halves HBM traffic of this memory-bound op; compute stays f32.
    x_bf16 = x.astype(jnp.bfloat16)

    out = jax.block_until_ready(
        fully_connected(x_bf16, w, b, gamma, beta, mean, var))

    ref = jax.block_until_ready(
        reference(x_bf16.astype(jnp.float32), w, b, gamma, beta, mean, var))
    np.testing.assert_allclose(np.asarray(out.astype(jnp.float32)),
                               np.asarray(ref), rtol=2e-2, atol=2e-2)

    print("KERNEL_OK")
</pallas_src>

<mosaic_0001>
module attributes {stable_mosaic.version = 11 : i64} {
  func.func @fc_res_kernel(%arg0: i32, %arg1: memref<8x128xbf16, #tpu.memory_space<vmem>>, %arg2: memref<3x128x128xf32, #tpu.memory_space<vmem>>, %arg3: memref<3x3x128xf32, #tpu.memory_space<vmem>>, %arg4: memref<8x128xbf16, #tpu.memory_space<vmem>>) attributes {dimension_semantics = [#tpu.dimension_semantics<parallel>], iteration_bounds = array<i64: 2>, scalar_prefetch = 0 : i64, scratch_operands = 0 : i64, tpu.core_type = #tpu.core_type<tc>, window_params = [{transform_indices = @transform_0, window_bounds = array<i64: 8, 128>}, {pipeline_mode = #tpu.pipeline_mode<synchronous>, transform_indices = @transform_1, window_bounds = array<i64: 3, 128, 128>}, {pipeline_mode = #tpu.pipeline_mode<synchronous>, transform_indices = @transform_2, window_bounds = array<i64: 3, 3, 128>}, {transform_indices = @transform_3, window_bounds = array<i64: 8, 128>}]} {
    %c0 = arith.constant 0 : index
    %c0_0 = arith.constant 0 : index
    %c0_1 = arith.constant 0 : index
    %0 = vector.load %arg3[%c0, %c0_0, %c0_1] : memref<3x3x128xf32, #tpu.memory_space<vmem>>, vector<3x3x128xf32>
    %c0_2 = arith.constant 0 : index
    %c0_3 = arith.constant 0 : index
    %1 = vector.load %arg1[%c0_2, %c0_3] : memref<8x128xbf16, #tpu.memory_space<vmem>>, vector<8x128xbf16>
    %2 = arith.extf %1 : vector<8x128xbf16> to vector<8x128xf32>
    %c0_4 = arith.constant 0 : index
    %c0_5 = arith.constant 0 : index
    %c0_6 = arith.constant 0 : index
    %3 = vector.load %arg2[%c0_4, %c0_5, %c0_6] : memref<3x128x128xf32, #tpu.memory_space<vmem>>, vector<1x128x128xf32>
    %4 = vector.shape_cast %3 : vector<1x128x128xf32> to vector<128x128xf32>
    %cst = arith.constant dense<0.000000e+00> : vector<8x128xf32>
    %5 = tpu.matmul %2, %4, %cst {dimension_numbers = #tpu.dot_dimension_numbers<[1], [0], [0], [1], [0, 0, 1, 1], [], []>} : vector<8x128xf32>, vector<128x128xf32>, vector<8x128xf32> -> vector<8x128xf32>
    %6 = vector.extract_strided_slice %0 {offsets = [0, 0, 0], sizes = [1, 1, 128], strides = [1, 1, 1]} : vector<3x3x128xf32> to vector<1x1x128xf32>
    %7 = vector.shape_cast %6 : vector<1x1x128xf32> to vector<128xf32>
    %8 = vector.shape_cast %7 : vector<128xf32> to vector<1x128xf32>
    %9 = vector.broadcast %8 : vector<1x128xf32> to vector<8x128xf32>
    %10 = arith.addf %5, %9 : vector<8x128xf32>
    %cst_7 = arith.constant 0.000000e+00 : f32
    %11 = vector.broadcast %cst_7 : f32 to vector<8x128xf32>
    %12 = arith.maximumf %10, %11 : vector<8x128xf32>
    %13 = vector.extract_strided_slice %0 {offsets = [0, 1, 0], sizes = [1, 1, 128], strides = [1, 1, 1]} : vector<3x3x128xf32> to vector<1x1x128xf32>
    %14 = vector.shape_cast %13 : vector<1x1x128xf32> to vector<128xf32>
    %15 = vector.shape_cast %14 : vector<128xf32> to vector<1x128xf32>
    %16 = vector.broadcast %15 : vector<1x128xf32> to vector<8x128xf32>
    %17 = arith.mulf %12, %16 : vector<8x128xf32>
    %18 = vector.extract_strided_slice %0 {offsets = [0, 2, 0], sizes = [1, 1, 128], strides = [1, 1, 1]} : vector<3x3x128xf32> to vector<1x1x128xf32>
    %19 = vector.shape_cast %18 : vector<1x1x128xf32> to vector<128xf32>
    %20 = vector.shape_cast %19 : vector<128xf32> to vector<1x128xf32>
    %21 = vector.broadcast %20 : vector<1x128xf32> to vector<8x128xf32>
    %22 = arith.addf %17, %21 : vector<8x128xf32>
    %23 = arith.addf %22, %2 : vector<8x128xf32>
    %c1 = arith.constant 1 : index
    %c0_8 = arith.constant 0 : index
    %c0_9 = arith.constant 0 : index
    %24 = vector.load %arg2[%c1, %c0_8, %c0_9] : memref<3x128x128xf32, #tpu.memory_space<vmem>>, vector<1x128x128xf32>
    %25 = vector.shape_cast %24 : vector<1x128x128xf32> to vector<128x128xf32>
    %cst_10 = arith.constant dense<0.000000e+00> : vector<8x128xf32>
    %26 = tpu.matmul %23, %25, %cst_10 {dimension_numbers = #tpu.dot_dimension_numbers<[1], [0], [0], [1], [0, 0, 1, 1], [], []>} : vector<8x128xf32>, vector<128x128xf32>, vector<8x128xf32> -> vector<8x128xf32>
    %27 = vector.extract_strided_slice %0 {offsets = [1, 0, 0], sizes = [1, 1, 128], strides = [1, 1, 1]} : vector<3x3x128xf32> to vector<1x1x128xf32>
    %28 = vector.shape_cast %27 : vector<1x1x128xf32> to vector<128xf32>
    %29 = vector.shape_cast %28 : vector<128xf32> to vector<1x128xf32>
    %30 = vector.broadcast %29 : vector<1x128xf32> to vector<8x128xf32>
    %31 = arith.addf %26, %30 : vector<8x128xf32>
    %cst_11 = arith.constant 0.000000e+00 : f32
    %32 = vector.broadcast %cst_11 : f32 to vector<8x128xf32>
    %33 = arith.maximumf %31, %32 : vector<8x128xf32>
    %34 = vector.extract_strided_slice %0 {offsets = [1, 1, 0], sizes = [1, 1, 128], strides = [1, 1, 1]} : vector<3x3x128xf32> to vector<1x1x128xf32>
    %35 = vector.shape_cast %34 : vector<1x1x128xf32> to vector<128xf32>
    %36 = vector.shape_cast %35 : vector<128xf32> to vector<1x128xf32>
    %37 = vector.broadcast %36 : vector<1x128xf32> to vector<8x128xf32>
    %38 = arith.mulf %33, %37 : vector<8x128xf32>
    %39 = vector.extract_strided_slice %0 {offsets = [1, 2, 0], sizes = [1, 1, 128], strides = [1, 1, 1]} : vector<3x3x128xf32> to vector<1x1x128xf32>
    %40 = vector.shape_cast %39 : vector<1x1x128xf32> to vector<128xf32>
    %41 = vector.shape_cast %40 : vector<128xf32> to vector<1x128xf32>
    %42 = vector.broadcast %41 : vector<1x128xf32> to vector<8x128xf32>
    %43 = arith.addf %38, %42 : vector<8x128xf32>
    %44 = arith.addf %43, %23 : vector<8x128xf32>
    %c2 = arith.constant 2 : index
    %c0_12 = arith.constant 0 : index
    %c0_13 = arith.constant 0 : index
    %45 = vector.load %arg2[%c2, %c0_12, %c0_13] : memref<3x128x128xf32, #tpu.memory_space<vmem>>, vector<1x128x128xf32>
    %46 = vector.shape_cast %45 : vector<1x128x128xf32> to vector<128x128xf32>
    %cst_14 = arith.constant dense<0.000000e+00> : vector<8x128xf32>
    %47 = tpu.matmul %44, %46, %cst_14 {dimension_numbers = #tpu.dot_dimension_numbers<[1], [0], [0], [1], [0, 0, 1, 1], [], []>} : vector<8x128xf32>, vector<128x128xf32>, vector<8x128xf32> -> vector<8x128xf32>
    %48 = vector.extract_strided_slice %0 {offsets = [2, 0, 0], sizes = [1, 1, 128], strides = [1, 1, 1]} : vector<3x3x128xf32> to vector<1x1x128xf32>
    %49 = vector.shape_cast %48 : vector<1x1x128xf32> to vector<128xf32>
    %50 = vector.shape_cast %49 : vector<128xf32> to vector<1x128xf32>
    %51 = vector.broadcast %50 : vector<1x128xf32> to vector<8x128xf32>
    %52 = arith.addf %47, %51 : vector<8x128xf32>
    %cst_15 = arith.constant 0.000000e+00 : f32
    %53 = vector.broadcast %cst_15 : f32 to vector<8x128xf32>
    %54 = arith.maximumf %52, %53 : vector<8x128xf32>
    %55 = vector.extract_strided_slice %0 {offsets = [2, 1, 0], sizes = [1, 1, 128], strides = [1, 1, 1]} : vector<3x3x128xf32> to vector<1x1x128xf32>
    %56 = vector.shape_cast %55 : vector<1x1x128xf32> to vector<128xf32>
    %57 = vector.shape_cast %56 : vector<128xf32> to vector<1x128xf32>
    %58 = vector.broadcast %57 : vector<1x128xf32> to vector<8x128xf32>
    %59 = arith.mulf %54, %58 : vector<8x128xf32>
    %60 = vector.extract_strided_slice %0 {offsets = [2, 2, 0], sizes = [1, 1, 128], strides = [1, 1, 1]} : vector<3x3x128xf32> to vector<1x1x128xf32>
    %61 = vector.shape_cast %60 : vector<1x1x128xf32> to vector<128xf32>
    %62 = vector.shape_cast %61 : vector<128xf32> to vector<1x128xf32>
    %63 = vector.broadcast %62 : vector<1x128xf32> to vector<8x128xf32>
    %64 = arith.addf %59, %63 : vector<8x128xf32>
    %65 = arith.addf %64, %44 : vector<8x128xf32>
    %66 = arith.truncf %65 : vector<8x128xf32> to vector<8x128xbf16>
    %c0_16 = arith.constant 0 : index
    %c0_17 = arith.constant 0 : index
    %67 = vector.load %arg4[%c0_16, %c0_17] : memref<8x128xbf16, #tpu.memory_space<vmem>>, vector<8x128xbf16>
    tpu.vector_store %arg4[%c0_16, %c0_17], %66 {strides = array<i32>} : memref<8x128xbf16, #tpu.memory_space<vmem>>, vector<8x128xbf16>,
    return
  }
  func.func @transform_0(%arg0: i32) -> (i32, i32) {
    %c0_i32 = arith.constant 0 : i32
    %c0_i32_0 = arith.constant 0 : i32
    return %arg0, %c0_i32 : i32, i32
  }
  func.func @transform_1(%arg0: i32) -> (i32, i32, i32) {
    %c0_i32 = arith.constant 0 : i32
    %c0_i32_0 = arith.constant 0 : i32
    %c0_i32_1 = arith.constant 0 : i32
    %c0_i32_2 = arith.constant 0 : i32
    return %c0_i32, %c0_i32_0, %c0_i32_1 : i32, i32, i32
  }
  func.func @transform_2(%arg0: i32) -> (i32, i32, i32) {
    %c0_i32 = arith.constant 0 : i32
    %c0_i32_0 = arith.constant 0 : i32
    %c0_i32_1 = arith.constant 0 : i32
    %c0_i32_2 = arith.constant 0 : i32
    return %c0_i32, %c0_i32_0, %c0_i32_1 : i32, i32, i32
  }
  func.func @transform_3(%arg0: i32) -> (i32, i32) {
    %c0_i32 = arith.constant 0 : i32
    %c0_i32_0 = arith.constant 0 : i32
    return %arg0, %c0_i32 : i32, i32
  }
}

</mosaic_0001>

<llo_original>
// kernel: tpu_custom_call.1
$region0: #{tpu_custom_call.1}
  #allocation0 [shape = 'u32[]', space=smem, size = 0x4, offset = 0x4, fixed_abs, tag = 'smem constant byte address 0x4 - core index']
  #allocation1 [shape = 'u32[144,128]{1,0:T(1,128)}', space=vmem, size = 0x12000, scoped, tag = 'internal scratch']
  %s0 = inlined_call_operand.hbm [shape: bf16[16,128], index: 0, kind: input, shape index: {}]
  %s1 = inlined_call_operand.hbm [shape: f32[3,128,128], index: 1, kind: input, shape index: {}]
  %s2 = inlined_call_operand.hbm [shape: f32[3,3,128], index: 2, kind: input, shape index: {}]
  %s3 = inlined_call_operand.hbm [shape: bf16[16,128], index: 3, kind: output, shape index: {}]
  %s4 = sld [smem:[#allocation0]]
  $region57: #{tpu_custom_call.1} parent=0
    _
  %s6 = ssub.s32 1, %s4
  %s7 = scalar_select 0, %s6, %s4
  $region1: #{tpu_custom_call.1} parent=0
    #allocation2 [shape = 'u8[4096]{0}', space=vmem, size = 0x1000, scoped, tag = 'input window, operand 0']
    #allocation3 [shape = 's32[2]{0}', space=sflag, size = 0x8, scoped, tag = 'scoped memory for tpu_custom_call.1']
    #allocation4 [shape = 's32[2]{0}', space=sflag, size = 0x8, scoped, tag = 'scoped memory for tpu_custom_call.1']
    #allocation5 [shape = 'u8[196608]{0}', space=vmem, size = 0x30000, scoped, tag = 'input window, operand 1, single buffered']
    #allocation6 [shape = 's32[1]{0}', space=sflag, size = 0x4, scoped, tag = 'scoped memory for tpu_custom_call.1']
    #allocation7 [shape = 'u8[6144]{0}', space=vmem, size = 0x1800, scoped, tag = 'input window, operand 2, single buffered']
    #allocation8 [shape = 'u8[4096]{0}', space=vmem, size = 0x1000, scoped, tag = 'output window, operand 0']
    %8 = vsyncpa [#allocation3], 0
    %s9 = scalar_lea.sflag [#allocation3], 1
    %10 = vsyncpa %s9, 0
    %11 = vsyncpa [#allocation6], 0
    %12 = vsyncpa [#allocation4], 0
    %s13 = scalar_lea.sflag [#allocation4], 1
    %14 = vsyncpa %s13, 0
    loop: start=0, step=1, limit=4
    $region2: #{tpu_custom_call.1} parent=1 // loop_pre_header
      _
    $region3: #{tpu_custom_call.1} parent=1 // loop_header
      %s16 = sphi 0, %s20
      %p17 = scmp.ge.s32.totalorder %s16, 4
      %s26 = sphi 0, %s28
      %s29 = sphi 0, %s26
      %s30 = sphi 0, %s29
      %s46 = sphi 0, %s30
      %s50 = sphi 0, %s50
      %s52 = sphi 0, %s50
      %s53 = sphi 0, %s52
      %s67 = sphi 0, %s53
      %s71 = sphi 0, %s71
      %s73 = sphi 0, %s71
      %s74 = sphi 0, %s73
      %s88 = sphi 0, %s74
      %s94 = sphi 0, %s96
      %s97 = sphi 0, %s94
      %s98 = sphi 0, %s97
      %s114 = sphi 0, %s98
    $region4: #{tpu_custom_call.1} parent=1 // loop_header_branch
      %19 = sbr.rel (%p17) target = $region8
    $region5: #{tpu_custom_call.1} parent=1 // loop_body
      %s21 = ssub.s32 %s16, 1
      %s22 = ssub.s32 %s16, 2
      %s23 = sadd.s32 %s16, 1
      %s24 = ssub.s32 %s16, %s23
      %p25 = scmp.eq.s32.totalorder %s24, 0
      %s27 = sadd.s32 %s26, 1
      %s28 = scalar_select %p25, %s26, %s27
      %p31 = pneg %p25
      %p32 = scmp.eq.s32.totalorder %s16, 1
      %p33 = por %p31, %p32
      %p34 = scmp.ne.s32.totalorder %s26, %s29
      %p35 = scmp.eq.s32.totalorder %s16, 0
      %p36 = por %p34, %p35
      %p37 = scmp.ne.s32.totalorder %s26, %s29
      %p38 = scmp.eq.s32.totalorder %s21, 1
      %p39 = por %p37, %p38
      %p40 = scmp.ne.s32.totalorder %s29, %s30
      %p41 = scmp.eq.s32.totalorder %s21, 0
      %p42 = por %p40, %p41
      %p43 = scmp.ne.s32.totalorder %s29, %s30
      %p44 = scmp.eq.s32.totalorder %s22, 1
      %p45 = por %p43, %p44
      %p47 = scmp.ne.s32.totalorder %s30, %s46
      %p48 = scmp.eq.s32.totalorder %s22, 0
      %p49 = por %p47, %p48
      %s51 = sadd.s32 %s50, 1
      %p54 = scmp.eq.s32.totalorder %s16, 1
      %p55 = scmp.ne.s32.totalorder %s50, %s52
      %p56 = scmp.eq.s32.totalorder %s16, 0
      %p57 = por %p55, %p56
      %p58 = scmp.ne.s32.totalorder %s50, %s52
      %p59 = scmp.eq.s32.totalorder %s21, 1
      %p60 = por %p58, %p59
      %p61 = scmp.ne.s32.totalorder %s52, %s53
      %p62 = scmp.eq.s32.totalorder %s21, 0
      %p63 = por %p61, %p62
      %p64 = scmp.ne.s32.totalorder %s52, %s53
      %p65 = scmp.eq.s32.totalorder %s22, 1
      %p66 = por %p64, %p65
      %p68 = scmp.ne.s32.totalorder %s53, %s67
      %p69 = scmp.eq.s32.totalorder %s22, 0
      %p70 = por %p68, %p69
      %s72 = sadd.s32 %s71, 1
      %p75 = scmp.eq.s32.totalorder %s16, 1
      %p76 = scmp.ne.s32.totalorder %s71, %s73
      %p77 = scmp.eq.s32.totalorder %s16, 0
      %p78 = por %p76, %p77
      %p79 = scmp.ne.s32.totalorder %s71, %s73
      %p80 = scmp.eq.s32.totalorder %s21, 1
      %p81 = por %p79, %p80
      %p82 = scmp.ne.s32.totalorder %s73, %s74
      %p83 = scmp.eq.s32.totalorder %s21, 0
      %p84 = por %p82, %p83
      %p85 = scmp.ne.s32.totalorder %s73, %s74
      %p86 = scmp.eq.s32.totalorder %s22, 1
      %p87 = por %p85, %p86
      %p89 = scmp.ne.s32.totalorder %s74, %s88
      %p90 = scmp.eq.s32.totalorder %s22, 0
      %p91 = por %p89, %p90
      %s92 = ssub.s32 %s16, %s23
      %p93 = scmp.eq.s32.totalorder %s92, 0
      %s95 = sadd.s32 %s94, 1
      %s96 = scalar_select %p93, %s94, %s95
      %p99 = pneg %p93
      %p100 = scmp.eq.s32.totalorder %s16, 1
      %p101 = por %p99, %p100
      %p102 = scmp.ne.s32.totalorder %s94, %s97
      %p103 = scmp.eq.s32.totalorder %s16, 0
      %p104 = por %p102, %p103
      %p105 = scmp.ne.s32.totalorder %s94, %s97
      %p106 = scmp.eq.s32.totalorder %s21, 1
      %p107 = por %p105, %p106
      %p108 = scmp.ne.s32.totalorder %s97, %s98
      %p109 = scmp.eq.s32.totalorder %s21, 0
      %p110 = por %p108, %p109
      %p111 = scmp.ne.s32.totalorder %s97, %s98
      %p112 = scmp.eq.s32.totalorder %s22, 1
      %p113 = por %p111, %p112
      %p115 = scmp.ne.s32.totalorder %s98, %s114
      %p116 = scmp.eq.s32.totalorder %s22, 0
      %p117 = por %p115, %p116
      %p118 = scmp.le.s32.totalorder 1, %s16
      %p119 = scmp.lt.s32.totalorder %s16, 3
      %p120 = pnand %p118, %p119
      %p121 = pneg %p120
      // Predicated region
      $region9: #{tpu_custom_call.1} parent=5 // pred_check
        _
      $region10: #{tpu_custom_call.1} parent=5 // pred_check_branch
        %123 = sbr.rel (%p120) target = $region12
      $region11: #{tpu_custom_call.1} parent=5 // pred_region
        %s124 = ssub.s32 %s16, 1
        // Predicated region
        $region13: #{tpu_custom_call.1} parent=11 // pred_check
          %p125 = pneg %p63
        $region14: #{tpu_custom_call.1} parent=11 // pred_check_branch
          %127 = sbr.rel (%p125) target = $region16
        $region15: #{tpu_custom_call.1} parent=11 // pred_region
          %s129 = ssub.s32 6144, 6144
          %130 = vsyncadd [#allocation6], %s129
          %s131 = sshll.u32 [#allocation5], 4
          %s132 = int_to_ptr.vmem [resolvable:$true] %s131
          %137 = dma.hbm_to_vmem [thread:$0]  %s1, 6144, %s132, [#allocation6], 128, 128, 8
        $region16: #{tpu_custom_call.1} parent=11 // pred_fallthru
          _
        // Predicated region
        $region17: #{tpu_custom_call.1} parent=11 // pred_check
          %p138 = pneg %p84
        $region18: #{tpu_custom_call.1} parent=11 // pred_check_branch
          %140 = sbr.rel (%p138) target = $region20
        $region19: #{tpu_custom_call.1} parent=11 // pred_region
          %s142 = ssub.s32 192, 192
          %143 = vsyncadd [#allocation6], %s142
          %s144 = sshll.u32 [#allocation7], 4
          %s145 = int_to_ptr.vmem [resolvable:$true] %s144
          %150 = dma.hbm_to_vmem [thread:$0]  %s2, 192, %s145, [#allocation6], 64, 64, 4
        $region20: #{tpu_custom_call.1} parent=11 // pred_fallthru
          _
      $region12: #{tpu_custom_call.1} parent=5 // pred_fallthru
        _
      %p151 = scmp.lt.s32.totalorder %s16, 2
      // Predicated region
      $region21: #{tpu_custom_call.1} parent=5 // pred_check
        %p152 = pneg %p151
      $region22: #{tpu_custom_call.1} parent=5 // pred_check_branch
        %154 = sbr.rel (%p152) target = $region24
      $region23: #{tpu_custom_call.1} parent=5 // pred_region
        // Predicated region
        $region25: #{tpu_custom_call.1} parent=23 // pred_check
          %p155 = pneg %p36
        $region26: #{tpu_custom_call.1} parent=23 // pred_check_branch
          %157 = sbr.rel (%p155) target = $region28
        $region27: #{tpu_custom_call.1} parent=23 // pred_region
          %s158 = sand.u32 %s26, 1
          %s159 = scalar_lea.sflag [#allocation3], %s158
          %s160 = sand.u32 %s26, 1
          %s161 = smul.addr %s160, 4
          %s162 = scalar_lea.vmem [#allocation2], %s161
          %s164 = ssub.s32 64, 64
          %165 = vsyncadd %s159, %s164
          %s166 = smul.addr %s16, 64
          %s167 = scalar_lea.hbm %s0, %s166
          %s169 = sshll.u32 %s162, 4
          %s170 = int_to_ptr.vmem [resolvable:$true] %s169
          %172 = dma.hbm_to_vmem [thread:$0]  %s167, 64, %s170, %s159
        $region28: #{tpu_custom_call.1} parent=23 // pred_fallthru
          _
      $region24: #{tpu_custom_call.1} parent=5 // pred_fallthru
        _
      %p173 = scmp.le.s32.totalorder 1, %s16
      %p174 = scmp.lt.s32.totalorder %s16, 3
      %p175 = pnand %p173, %p174
      %p176 = pneg %p175
      // Predicated region
      $region29: #{tpu_custom_call.1} parent=5 // pred_check
        _
      $region30: #{tpu_custom_call.1} parent=5 // pred_check_branch
        %178 = sbr.rel (%p175) target = $region32
      $region31: #{tpu_custom_call.1} parent=5 // pred_region
        %s179 = ssub.s32 %s16, 1
        %s180 = sand.u32 %s29, 1
        %s181 = scalar_lea.sflag [#allocation3], %s180
        %s182 = sand.u32 %s29, 1
        %s183 = smul.addr %s182, 4
        %s184 = scalar_lea.vmem [#allocation2], %s183
        // Predicated region
        $region33: #{tpu_custom_call.1} parent=31 // pred_check
          %p185 = pneg %p42
        $region34: #{tpu_custom_call.1} parent=31 // pred_check_branch
          %187 = sbr.rel (%p185) target = $region36
        $region35: #{tpu_custom_call.1} parent=31 // pred_region
          %188 = dma.done %s181, 64
        $region36: #{tpu_custom_call.1} parent=31 // pred_fallthru
          _
        // Predicated region
        $region37: #{tpu_custom_call.1} parent=31 // pred_check
          %p189 = pneg %p63
        $region38: #{tpu_custom_call.1} parent=31 // pred_check_branch
          %191 = sbr.rel (%p189) target = $region40
        $region39: #{tpu_custom_call.1} parent=31 // pred_region
          %192 = dma.done [#allocation6], 6144
        $region40: #{tpu_custom_call.1} parent=31 // pred_fallthru
          _
        // Predicated region
        $region41: #{tpu_custom_call.1} parent=31 // pred_check
          %p193 = pneg %p84
        $region42: #{tpu_custom_call.1} parent=31 // pred_check_branch
          %195 = sbr.rel (%p193) target = $region44
        $region43: #{tpu_custom_call.1} parent=31 // pred_region
          %196 = dma.done [#allocation6], 192
        $region44: #{tpu_custom_call.1} parent=31 // pred_fallthru
          _
        %s197 = sand.u32 %s29, 1
        %s198 = scalar_lea.sflag [#allocation3], %s197
        %s199 = sand.u32 %s29, 1
        %s200 = smul.addr %s199, 4
        %s201 = scalar_lea.vmem [#allocation2], %s200
        %p202 = pneg %p42
        %p203 = pneg %p39
        %p204 = pneg %p63
        %p205 = pneg %p60
        %p206 = pneg %p84
        %p207 = pneg %p81
        %p208 = pneg %p110
        %p209 = pneg %p107
        %s210 = sand.u32 %s97, 1
        %s211 = scalar_lea.sflag [#allocation4], %s210
        %s212 = sand.u32 %s97, 1
        %s213 = smul.addr %s212, 4
        %s214 = scalar_lea.vmem [#allocation8], %s213
        %v215 = vld [vmem:[#allocation7] sm:$0x7]
        %v216 = vld [vmem:[#allocation7 + $0x4] sm:$0x7]
        %v217 = vld [vmem:[#allocation7 + $0x8] sm:$0x7]
        %v218 = vld [vmem:[%s184] sm:$0xf]
        %v219 = vunpack.c.l.bf16 %v218
        %v220 = vld [vmem:[#allocation5] sm:$0xff]
        %v221 = vld [vmem:[#allocation5 + $0x8] sm:$0xff]
        %v222 = vld [vmem:[#allocation5 + $0x10] sm:$0xff]
        %v223 = vld [vmem:[#allocation5 + $0x18] sm:$0xff]
        %v224 = vld [vmem:[#allocation5 + $0x20] sm:$0xff]
        %v225 = vld [vmem:[#allocation5 + $0x28] sm:$0xff]
        %v226 = vld [vmem:[#allocation5 + $0x30] sm:$0xff]
        %v227 = vld [vmem:[#allocation5 + $0x38] sm:$0xff]
        %v228 = vld [vmem:[#allocation5 + $0x40] sm:$0xff]
        %v229 = vld [vmem:[#allocation5 + $0x48] sm:$0xff]
        %v230 = vld [vmem:[#allocation5 + $0x50] sm:$0xff]
        %v231 = vld [vmem:[#allocation5 + $0x58] sm:$0xff]
        %v232 = vld [vmem:[#allocation5 + $0x60] sm:$0xff]
        %v233 = vld [vmem:[#allocation5 + $0x68] sm:$0xff]
        %v234 = vld [vmem:[#allocation5 + $0x70] sm:$0xff]
        %v235 = vld [vmem:[#allocation5 + $0x78] sm:$0xff]
        %v236 = vlaneseq
        %v237 = vshrl.u32 %v236, 7
        %v238 = vsub.s32 0, %v237
        %v239 = vrot.slane %v215, %v238
        %240 = vmatprep.subr.mxu0 0.0
        %241 = vmatpush1.msra.mxu0 %v235
        %242 = vmatprep.subr.mxu0 0.0
        %243 = vmatpush1.msra.mxu0 %v234
        %244 = vmatprep.subr.mxu0 0.0
        %245 = vmatpush1.msra.mxu0 %v233
        %246 = vmatprep.subr.mxu0 0.0
        %247 = vmatpush1.msra.mxu0 %v232
        %248 = vmatprep.subr.mxu0 0.0
        %249 = vmatpush1.msra.mxu0 %v231
        %250 = vmatprep.subr.mxu0 0.0
        %251 = vmatpush1.msra.mxu0 %v230
        %252 = vmatprep.subr.mxu0 0.0
        %253 = vmatpush1.msra.mxu0 %v229
        %254 = vmatprep.subr.mxu0 0.0
        %255 = vmatpush1.msra.mxu0 %v228
        %256 = vmatprep.subr.mxu0 0.0
        %257 = vmatpush1.msra.mxu0 %v227
        %258 = vmatprep.subr.mxu0 0.0
        %259 = vmatpush1.msra.mxu0 %v226
        %260 = vmatprep.subr.mxu0 0.0
        %261 = vmatpush1.msra.mxu0 %v225
        %262 = vmatprep.subr.mxu0 0.0
        %263 = vmatpush1.msra.mxu0 %v224
        %264 = vmatprep.subr.mxu0 0.0
        %265 = vmatpush1.msra.mxu0 %v223
        %266 = vmatprep.subr.mxu0 0.0
        %267 = vmatpush1.msra.mxu0 %v222
        %268 = vmatprep.subr.mxu0 0.0
        %269 = vmatpush1.msra.mxu0 %v221
        %270 = vmatprep.subr.mxu0 0.0
        %271 = vmatpush1.msra.mxu0 %v220
        %272 = vmatprep.subr.mxu0 0.0
        %273 = vmatpush2.msra.mxu0 0.0
        %274 = vmatprep.subr.mxu0 0.0
        %275 = vmatpush2.msra.mxu0 0.0
        %276 = vmatprep.subr.mxu0 0.0
        %277 = vmatpush2.msra.mxu0 0.0
        %278 = vmatprep.subr.mxu0 0.0
        %279 = vmatpush2.msra.mxu0 0.0
        %280 = vmatprep.subr.mxu0 0.0
        %281 = vmatpush2.msra.mxu0 0.0
        %282 = vmatprep.subr.mxu0 0.0
        %283 = vmatpush2.msra.mxu0 0.0
        %284 = vmatprep.subr.mxu0 0.0
        %285 = vmatpush2.msra.mxu0 0.0
        %286 = vmatprep.subr.mxu0 0.0
        %287 = vmatpush2.msra.mxu0 0.0
        %288 = vmatprep.subr.mxu0 0.0
        %289 = vmatpush2.msra.mxu0 0.0
        %290 = vmatprep.subr.mxu0 0.0
        %291 = vmatpush2.msra.mxu0 0.0
        %292 = vmatprep.subr.mxu0 0.0
        %293 = vmatpush2.msra.mxu0 0.0
        %294 = vmatprep.subr.mxu0 0.0
        %295 = vmatpush2.msra.mxu0 0.0
        %296 = vmatprep.subr.mxu0 0.0
        %297 = vmatpush2.msra.mxu0 0.0
        %298 = vmatprep.subr.mxu0 0.0
        %299 = vmatpush2.msra.mxu0 0.0
        %300 = vmatprep.subr.mxu0 0.0
        %301 = vmatpush2.msra.mxu0 0.0
        %302 = vmatprep.subr.mxu0 0.0
        %303 = vmatpush2.msra.mxu0 0.0
        %304 = vmatprep.mubr.f32.mxu0 0.0
        %305 = vmatmul.mubr.f32.gmra.mxu0 %v219
        %v306 = vpop.f32.mrf.mxu0
        %v307 = vadd.f32 %v239, %v306
        %v308 = vpop.f32.mrf.mxu0
        %309 = vdwg.mxu0
        %v310 = vmax.f32 %v307, 0.0
        %v311 = vlaneseq
        %v312 = vshrl.u32 %v311, 7
        %v313 = vsub.s32 1, %v312
        %v314 = vrot.slane %v215, %v313
        %v315 = vmul.f32 %v310, %v314
        %v316 = vlaneseq
        %v317 = vshrl.u32 %v316, 7
        %v318 = vsub.s32 2, %v317
        %v319 = vrot.slane %v215, %v318
        %v320 = vadd.f32 %v315, %v319
        %v321 = vadd.f32 %v320, %v219
        %s322 = scalar_lea.vmem [#allocation5], 128
        %v323 = vld [vmem:[%s322] sm:$0xff]
        %v324 = vld [vmem:[%s322 + $0x8] sm:$0xff]
        %v325 = vld [vmem:[%s322 + $0x10] sm:$0xff]
        %v326 = vld [vmem:[%s322 + $0x18] sm:$0xff]
        %v327 = vld [vmem:[%s322 + $0x20] sm:$0xff]
        %v328 = vld [vmem:[%s322 + $0x28] sm:$0xff]
        %v329 = vld [vmem:[%s322 + $0x30] sm:$0xff]
        %v330 = vld [vmem:[%s322 + $0x38] sm:$0xff]
        %v331 = vld [vmem:[%s322 + $0x40] sm:$0xff]
        %v332 = vld [vmem:[%s322 + $0x48] sm:$0xff]
        %v333 = vld [vmem:[%s322 + $0x50] sm:$0xff]
        %v334 = vld [vmem:[%s322 + $0x58] sm:$0xff]
        %v335 = vld [vmem:[%s322 + $0x60] sm:$0xff]
        %v336 = vld [vmem:[%s322 + $0x68] sm:$0xff]
        %v337 = vld [vmem:[%s322 + $0x70] sm:$0xff]
        %v338 = vld [vmem:[%s322 + $0x78] sm:$0xff]
        %v339 = vlaneseq
        %v340 = vshrl.u32 %v339, 7
        %v341 = vsub.s32 0, %v340
        %v342 = vrot.slane %v216, %v341
        %343 = vmatprep.subr.mxu0 0.0
        %344 = vmatpush1.msra.mxu0 %v338
        %345 = vmatprep.subr.mxu0 0.0
        %346 = vmatpush1.msra.mxu0 %v337
        %347 = vmatprep.subr.mxu0 0.0
        %348 = vmatpush1.msra.mxu0 %v336
        %349 = vmatprep.subr.mxu0 0.0
        %350 = vmatpush1.msra.mxu0 %v335
        %351 = vmatprep.subr.mxu0 0.0
        %352 = vmatpush1.msra.mxu0 %v334
        %353 = vmatprep.subr.mxu0 0.0
        %354 = vmatpush1.msra.mxu0 %v333
        %355 = vmatprep.subr.mxu0 0.0
        %356 = vmatpush1.msra.mxu0 %v332
        %357 = vmatprep.subr.mxu0 0.0
        %358 = vmatpush1.msra.mxu0 %v331
        %359 = vmatprep.subr.mxu0 0.0
        %360 = vmatpush1.msra.mxu0 %v330
        %361 = vmatprep.subr.mxu0 0.0
        %362 = vmatpush1.msra.mxu0 %v329
        %363 = vmatprep.subr.mxu0 0.0
        %364 = vmatpush1.msra.mxu0 %v328
        %365 = vmatprep.subr.mxu0 0.0
        %366 = vmatpush1.msra.mxu0 %v327
        %367 = vmatprep.subr.mxu0 0.0
        %368 = vmatpush1.msra.mxu0 %v326
        %369 = vmatprep.subr.mxu0 0.0
        %370 = vmatpush1.msra.mxu0 %v325
        %371 = vmatprep.subr.mxu0 0.0
        %372 = vmatpush1.msra.mxu0 %v324
        %373 = vmatprep.subr.mxu0 0.0
        %374 = vmatpush1.msra.mxu0 %v323
        %375 = vmatprep.subr.mxu0 0.0
        %376 = vmatpush2.msra.mxu0 0.0
        %377 = vmatprep.subr.mxu0 0.0
        %378 = vmatpush2.msra.mxu0 0.0
        %379 = vmatprep.subr.mxu0 0.0
        %380 = vmatpush2.msra.mxu0 0.0
        %381 = vmatprep.subr.mxu0 0.0
        %382 = vmatpush2.msra.mxu0 0.0
        %383 = vmatprep.subr.mxu0 0.0
        %384 = vmatpush2.msra.mxu0 0.0
        %385 = vmatprep.subr.mxu0 0.0
        %386 = vmatpush2.msra.mxu0 0.0
        %387 = vmatprep.subr.mxu0 0.0
        %388 = vmatpush2.msra.mxu0 0.0
        %389 = vmatprep.subr.mxu0 0.0
        %390 = vmatpush2.msra.mxu0 0.0
        %391 = vmatprep.subr.mxu0 0.0
        %392 = vmatpush2.msra.mxu0 0.0
        %393 = vmatprep.subr.mxu0 0.0
        %394 = vmatpush2.msra.mxu0 0.0
        %395 = vmatprep.subr.mxu0 0.0
        %396 = vmatpush2.msra.mxu0 0.0
        %397 = vmatprep.subr.mxu0 0.0
        %398 = vmatpush2.msra.mxu0 0.0
        %399 = vmatprep.subr.mxu0 0.0
        %400 = vmatpush2.msra.mxu0 0.0
        %401 = vmatprep.subr.mxu0 0.0
        %402 = vmatpush2.msra.mxu0 0.0
        %403 = vmatprep.subr.mxu0 0.0
        %404 = vmatpush2.msra.mxu0 0.0
        %405 = vmatprep.subr.mxu0 0.0
        %406 = vmatpush2.msra.mxu0 0.0
        %407 = vmatprep.mubr.f32.mxu0 0.0
        %408 = vmatmul.mubr.f32.gmra.mxu0 %v321
        %v409 = vpop.f32.mrf.mxu0
        %v410 = vadd.f32 %v342, %v409
        %v411 = vpop.f32.mrf.mxu0
        %412 = vdwg.mxu0
        %v413 = vmax.f32 %v410, 0.0
        %v414 = vlaneseq
        %v415 = vshrl.u32 %v414, 7
        %v416 = vsub.s32 1, %v415
        %v417 = vrot.slane %v216, %v416
        %v418 = vmul.f32 %v413, %v417
        %v419 = vlaneseq
        %v420 = vshrl.u32 %v419, 7
        %v421 = vsub.s32 2, %v420
        %v422 = vrot.slane %v216, %v421
        %v423 = vadd.f32 %v418, %v422
        %v424 = vadd.f32 %v423, %v321
        %s425 = scalar_lea.vmem [#allocation5], 256
        %v426 = vld [vmem:[%s425] sm:$0xff]
        %v427 = vld [vmem:[%s425 + $0x8] sm:$0xff]
        %v428 = vld [vmem:[%s425 + $0x10] sm:$0xff]
        %v429 = vld [vmem:[%s425 + $0x18] sm:$0xff]
        %v430 = vld [vmem:[%s425 + $0x20] sm:$0xff]
        %v431 = vld [vmem:[%s425 + $0x28] sm:$0xff]
        %v432 = vld [vmem:[%s425 + $0x30] sm:$0xff]
        %v433 = vld [vmem:[%s425 + $0x38] sm:$0xff]
        %v434 = vld [vmem:[%s425 + $0x40] sm:$0xff]
        %v435 = vld [vmem:[%s425 + $0x48] sm:$0xff]
        %v436 = vld [vmem:[%s425 + $0x50] sm:$0xff]
        %v437 = vld [vmem:[%s425 + $0x58] sm:$0xff]
        %v438 = vld [vmem:[%s425 + $0x60] sm:$0xff]
        %v439 = vld [vmem:[%s425 + $0x68] sm:$0xff]
        %v440 = vld [vmem:[%s425 + $0x70] sm:$0xff]
        %v441 = vld [vmem:[%s425 + $0x78] sm:$0xff]
        %v442 = vlaneseq
        %v443 = vshrl.u32 %v442, 7
        %v444 = vsub.s32 0, %v443
        %v445 = vrot.slane %v217, %v444
        %446 = vmatprep.subr.mxu0 0.0
        %447 = vmatpush1.msra.mxu0 %v441
        %448 = vmatprep.subr.mxu0 0.0
        %449 = vmatpush1.msra.mxu0 %v440
        %450 = vmatprep.subr.mxu0 0.0
        %451 = vmatpush1.msra.mxu0 %v439
        %452 = vmatprep.subr.mxu0 0.0
        %453 = vmatpush1.msra.mxu0 %v438
        %454 = vmatprep.subr.mxu0 0.0
        %455 = vmatpush1.msra.mxu0 %v437
        %456 = vmatprep.subr.mxu0 0.0
        %457 = vmatpush1.msra.mxu0 %v436
        %458 = vmatprep.subr.mxu0 0.0
        %459 = vmatpush1.msra.mxu0 %v435
        %460 = vmatprep.subr.mxu0 0.0
        %461 = vmatpush1.msra.mxu0 %v434
        %462 = vmatprep.subr.mxu0 0.0
        %463 = vmatpush1.msra.mxu0 %v433
        %464 = vmatprep.subr.mxu0 0.0
        %465 = vmatpush1.msra.mxu0 %v432
        %466 = vmatprep.subr.mxu0 0.0
        %467 = vmatpush1.msra.mxu0 %v431
        %468 = vmatprep.subr.mxu0 0.0
        %469 = vmatpush1.msra.mxu0 %v430
        %470 = vmatprep.subr.mxu0 0.0
        %471 = vmatpush1.msra.mxu0 %v429
        %472 = vmatprep.subr.mxu0 0.0
        %473 = vmatpush1.msra.mxu0 %v428
        %474 = vmatprep.subr.mxu0 0.0
        %475 = vmatpush1.msra.mxu0 %v427
        %476 = vmatprep.subr.mxu0 0.0
        %477 = vmatpush1.msra.mxu0 %v426
        %478 = vmatprep.subr.mxu0 0.0
        %479 = vmatpush2.msra.mxu0 0.0
        %480 = vmatprep.subr.mxu0 0.0
        %481 = vmatpush2.msra.mxu0 0.0
        %482 = vmatprep.subr.mxu0 0.0
        %483 = vmatpush2.msra.mxu0 0.0
        %484 = vmatprep.subr.mxu0 0.0
        %485 = vmatpush2.msra.mxu0 0.0
        %486 = vmatprep.subr.mxu0 0.0
        %487 = vmatpush2.msra.mxu0 0.0
        %488 = vmatprep.subr.mxu0 0.0
        %489 = vmatpush2.msra.mxu0 0.0
        %490 = vmatprep.subr.mxu0 0.0
        %491 = vmatpush2.msra.mxu0 0.0
        %492 = vmatprep.subr.mxu0 0.0
        %493 = vmatpush2.msra.mxu0 0.0
        %494 = vmatprep.subr.mxu0 0.0
        %495 = vmatpush2.msra.mxu0 0.0
        %496 = vmatprep.subr.mxu0 0.0
        %497 = vmatpush2.msra.mxu0 0.0
        %498 = vmatprep.subr.mxu0 0.0
        %499 = vmatpush2.msra.mxu0 0.0
        %500 = vmatprep.subr.mxu0 0.0
        %501 = vmatpush2.msra.mxu0 0.0
        %502 = vmatprep.subr.mxu0 0.0
        %503 = vmatpush2.msra.mxu0 0.0
        %504 = vmatprep.subr.mxu0 0.0
        %505 = vmatpush2.msra.mxu0 0.0
        %506 = vmatprep.subr.mxu0 0.0
        %507 = vmatpush2.msra.mxu0 0.0
        %508 = vmatprep.subr.mxu0 0.0
        %509 = vmatpush2.msra.mxu0 0.0
        %510 = vmatprep.mubr.f32.mxu0 0.0
        %511 = vmatmul.mubr.f32.gmra.mxu0 %v424
        %v512 = vpop.f32.mrf.mxu0
        %v513 = vadd.f32 %v445, %v512
        %v514 = vpop.f32.mrf.mxu0
        %515 = vdwg.mxu0
        %v516 = vmax.f32 %v513, 0.0
        %v517 = vlaneseq
        %v518 = vshrl.u32 %v517, 7
        %v519 = vsub.s32 1, %v518
        %v520 = vrot.slane %v217, %v519
        %v521 = vmul.f32 %v516, %v520
        %v522 = vlaneseq
        %v523 = vshrl.u32 %v522, 7
        %v524 = vsub.s32 2, %v523
        %v525 = vrot.slane %v217, %v524
        %v526 = vadd.f32 %v521, %v525
        %v527 = vadd.f32 %v526, %v424
        %v528 = vpack.c.bf16 %v527, %v527
        %529 = vst [vmem:[%s214] sm:$0xf] %v528
        %s530 = sand.u32 %s97, 1
        %s531 = scalar_lea.sflag [#allocation4], %s530
        %s532 = sand.u32 %s97, 1
        %s533 = smul.addr %s532, 4
        %s534 = scalar_lea.vmem [#allocation8], %s533
        // Predicated region
        $region45: #{tpu_custom_call.1} parent=31 // pred_check
          %p535 = pneg %p107
        $region46: #{tpu_custom_call.1} parent=31 // pred_check_branch
          %537 = sbr.rel (%p535) target = $region48
        $region47: #{tpu_custom_call.1} parent=31 // pred_region
          %s539 = ssub.s32 64, 64
          %540 = vsyncadd %s531, %s539
          %s541 = smul.addr %s21, 64
          %s542 = scalar_lea.hbm %s3, %s541
          %s544 = sshll.u32 %s534, 4
          %s545 = int_to_ptr.vmem [resolvable:$true] %s544
          %547 = dma.vmem_to_hbm [thread:$0]  %s545, 64, %s542, %s531
        $region48: #{tpu_custom_call.1} parent=31 // pred_fallthru
          _
      $region32: #{tpu_custom_call.1} parent=5 // pred_fallthru
        _
      %p548 = scmp.le.s32.totalorder 2, %s16
      // Predicated region
      $region49: #{tpu_custom_call.1} parent=5 // pred_check
        %p549 = pneg %p548
      $region50: #{tpu_custom_call.1} parent=5 // pred_check_branch
        %551 = sbr.rel (%p549) target = $region52
      $region51: #{tpu_custom_call.1} parent=5 // pred_region
        %s552 = ssub.s32 %s16, 2
        // Predicated region
        $region53: #{tpu_custom_call.1} parent=51 // pred_check
          %p553 = pneg %p113
        $region54: #{tpu_custom_call.1} parent=51 // pred_check_branch
          %555 = sbr.rel (%p553) target = $region56
        $region55: #{tpu_custom_call.1} parent=51 // pred_region
          %s556 = sand.u32 %s98, 1
          %s557 = scalar_lea.sflag [#allocation4], %s556
          %s558 = sand.u32 %s98, 1
          %s559 = smul.addr %s558, 4
          %s560 = scalar_lea.vmem [#allocation8], %s559
          %561 = dma.done %s557, 64
        $region56: #{tpu_custom_call.1} parent=51 // pred_fallthru
          _
      $region52: #{tpu_custom_call.1} parent=5 // pred_fallthru
        _
    $region6: #{tpu_custom_call.1} parent=1 // loop_footer
      %s20 = sadd.s32 1, %s16
    $region7: #{tpu_custom_call.1} parent=1 // loop_footer_branch
      %15 = sbr.rel target = $region3
    $region8: #{tpu_custom_call.1} parent=1 // loop_exit
      _
    %562 = vsyncpa [#allocation3], 1
    %s563 = scalar_lea.sflag [#allocation3], 1
    %564 = vsyncpa %s563, 1
    %565 = vsyncpa [#allocation6], 1
    %566 = vsyncpa [#allocation4], 1
    %s567 = scalar_lea.sflag [#allocation4], 1
    %568 = vsyncpa %s567, 1

</llo_original>
